<compile_context>
chip_gen: v5e
topology: v5e:2x2
jax: 0.10.0
libtpu: 0.0.40
codegen_flags: <defaults>
</compile_context>

<pallas_src>
import functools

import jax
import jax.numpy as jnp
from jax.experimental import pallas as pl
from jax.experimental.pallas import tpu as pltpu

EPS = 1e-5  # PyTorch InstanceNorm2d default eps; biased variance; no affine


def resblock_kernel(x_ref, w_ref, o_ref, pad_ref, stk_ref, *,
                    H, W, bb, cin, residual):
    """Fused 3x3 conv (one stacked MXU matmul) + InstanceNorm + ReLU (+ x)."""
    HW = H * W

    # Horizontal row-wrap masks, built in-kernel (a few VPU ops; no DMA input).
    col = jax.lax.broadcasted_iota(jnp.int32, (1, HW), 1)
    if W & (W - 1) == 0:            # power-of-two fast path
        col = col & (W - 1)
    else:
        col = col % W
    mask_l = (col != 0).astype(jnp.float32)        # kills dw == 0 wrap taps
    mask_r = (col != W - 1).astype(jnp.float32)    # kills dw == 2 wrap taps

    # Zero the padded-image scratch once; only its centre is rewritten per
    # sample, so the halo stays zero for every sample in this batch block.
    pad_ref[...] = jnp.zeros_like(pad_ref)

    for bi in range(bb):                            # static unroll over batch block
        x = x_ref[bi]                               # (Cin, HW) f32
        # Centre of the H-padded, flattened image (leading zero + one zero row).
        pad_ref[:, W + 1:W + 1 + HW] = x

        # Stacked conv operand: row block t = dw*3 + dh holds the (Cin, HW)
        # shifted tap (dh, dw); wrap masks are applied while stacking.
        for dw in range(3):
            m = mask_l if dw == 0 else (mask_r if dw == 2 else None)
            for dh in range(3):
                t = dw * 3 + dh
                start = dh * W + dw                 # static lane offset
                s = pad_ref[:, start:start + HW]
                if m is not None:
                    s = s * m
                stk_ref[t * cin:(t + 1) * cin, :] = s

        # Single MXU matmul, bf16 operands, f32 accumulation:
        #   (Cout, 9*Cin) x (9*Cin, HW) -> (Cout, HW)
        conv = jnp.dot(w_ref[...], stk_ref[...].astype(jnp.bfloat16),
                       preferred_element_type=jnp.float32)
        # (bias is mathematically dead under mean-subtracting InstanceNorm)

        # InstanceNorm2d (no affine, biased variance), single-pass stats.
        inv_n = 1.0 / HW
        s1 = jnp.sum(conv, axis=1, keepdims=True)
        s2 = jnp.sum(conv * conv, axis=1, keepdims=True)
        mean = s1 * inv_n
        var = jnp.maximum(s2 * inv_n - mean * mean, 0.0)   # clamp cancellation
        inv = jax.lax.rsqrt(var + EPS)                     # EUP
        y = jnp.maximum((conv - mean) * inv, 0.0)          # ReLU

        if residual:
            y = y + x                                       # exact f32 residual

        o_ref[bi] = y                                       # lane-dense (Cout, HW)


def resblock_forward(x, w, b=None, *, samples_per_step=None):
    """ResBlock forward.  `b` (conv bias) is accepted for API parity but is a
    mathematical no-op under the non-affine, mean-subtracting InstanceNorm."""
    B, Cin, H, W = x.shape
    Cout = w.shape[0]
    HW = H * W
    Lin = (H + 2) * W + 2           # H-padded, flattened, +1 zero on each end
    residual = (Cin == Cout)
    del b                           # dead: IN subtracts the per-channel mean

    if x.dtype != jnp.float32:
        x = x.astype(jnp.float32)
    xf = x.reshape(B, Cin, HW)      # contiguous reshape; no pad / extra HBM copy

    # Packed weights, dw-major tap order: column (dw*3+dh)*Cin + i = w[o,i,dh,dw].
    wt = jnp.transpose(w, (0, 3, 2, 1)).reshape(Cout, 9 * Cin).astype(jnp.bfloat16)

    # Batch blocking: <= 2 fat "parallel" grid steps (both v7x TCs get work
    # when B >= 2; fewer per-step overheads on single-TC v5e/v6e).
    if samples_per_step is None:
        samples_per_step = B // 2 if (B >= 2 and B % 2 == 0) else 1
    bb = samples_per_step
    assert B % bb == 0, (B, bb)

    kernel = functools.partial(resblock_kernel, H=H, W=W, bb=bb, cin=Cin,
                               residual=residual)

    out = pl.pallas_call(
        kernel,
        out_shape=jax.ShapeDtypeStruct((B, Cout, HW), jnp.float32),
        grid_spec=pltpu.PrefetchScalarGridSpec(
            num_scalar_prefetch=0,
            grid=(B // bb,),
            in_specs=[
                pl.BlockSpec((bb, Cin, HW), lambda i: (i, 0, 0)),
                pl.BlockSpec((Cout, 9 * Cin), lambda i: (0, 0)),
            ],
            out_specs=pl.BlockSpec((bb, Cout, HW), lambda i: (i, 0, 0)),
            scratch_shapes=[
                pltpu.VMEM((Cin, Lin), jnp.float32),       # zero-padded image
                pltpu.VMEM((9 * Cin, HW), jnp.float32),    # stacked conv operand
            ],
        ),
        compiler_params=pltpu.CompilerParams(
            dimension_semantics=("parallel",)),
    )(xf, wt)

    return out.reshape(B, Cout, H, W)


def reference(x, w, b):
    """Pure-JAX reference mirroring the PyTorch ResBlock forward (with bias)."""
    conv = jax.lax.conv_general_dilated(
        x, w, (1, 1), ((1, 1), (1, 1)),
        dimension_numbers=("NCHW", "OIHW", "NCHW"))
    conv = conv + b[None, :, None, None]
    mean = conv.mean(axis=(2, 3), keepdims=True)
    var = ((conv - mean) ** 2).mean(axis=(2, 3), keepdims=True)
    y = jnp.maximum((conv - mean) * jax.lax.rsqrt(var + EPS), 0.0)
    if x.shape[1] == w.shape[0]:
        y = y + x
    return y


if __name__ == "__main__":
    key = jax.random.PRNGKey(0)
    k1, k2, k3, k4, k5, k6 = jax.random.split(key, 6)

    # Case 1: in_channel == out_channel  ->  residual branch.
    B, C, H, W = 2, 8, 16, 16
    x = jax.random.normal(k1, (B, C, H, W), jnp.float32)
    fan = C * 9
    w1 = jax.random.uniform(k2, (C, C, 3, 3), jnp.float32, -1.0, 1.0) / jnp.sqrt(fan)
    b1 = jax.random.uniform(k3, (C,), jnp.float32, -1.0, 1.0) / jnp.sqrt(fan)

    out = jax.block_until_ready(resblock_forward(x, w1, b1))
    ref = reference(x, w1, b1)
    assert out.shape == (B, C, H, W), out.shape
    # bf16 MXU operands -> looser tolerance than an all-f32 pipeline.
    assert jnp.allclose(out, ref, atol=2e-2, rtol=2e-2), \
        float(jnp.max(jnp.abs(out - ref)))

    # Case 2: in_channel != out_channel  ->  no residual.
    Cin, Cout = 4, 8
    x2 = jax.random.normal(k4, (B, Cin, H, W), jnp.float32)
    fan2 = Cin * 9
    w2 = jax.random.uniform(k5, (Cout, Cin, 3, 3), jnp.float32, -1.0, 1.0) / jnp.sqrt(fan2)
    b2 = jax.random.uniform(k6, (Cout,), jnp.float32, -1.0, 1.0) / jnp.sqrt(fan2)

    out2 = jax.block_until_ready(resblock_forward(x2, w2, b2))
    ref2 = reference(x2, w2, b2)
    assert out2.shape == (B, Cout, H, W), out2.shape
    assert jnp.allclose(out2, ref2, atol=2e-2, rtol=2e-2), \
        float(jnp.max(jnp.abs(out2 - ref2)))

    print("KERNEL_OK")
</pallas_src>

<mosaic_0001>
module attributes {stable_mosaic.version = 11 : i64} {
  func.func @resblock_kernel(%arg0: i32, %arg1: memref<1x8x256xf32, #tpu.memory_space<vmem>>, %arg2: memref<8x72xbf16, #tpu.memory_space<vmem>>, %arg3: memref<1x8x256xf32, #tpu.memory_space<vmem>>, %arg4: memref<8x290xf32, #tpu.memory_space<vmem>>, %arg5: memref<72x256xf32, #tpu.memory_space<vmem>>) attributes {dimension_semantics = [#tpu.dimension_semantics<parallel>], iteration_bounds = array<i64: 2>, scalar_prefetch = 0 : i64, scratch_operands = 2 : i64, tpu.core_type = #tpu.core_type<tc>, window_params = [{transform_indices = @transform_0, window_bounds = array<i64: 1, 8, 256>}, {pipeline_mode = #tpu.pipeline_mode<synchronous>, transform_indices = @transform_1, window_bounds = array<i64: 8, 72>}, {transform_indices = @transform_2, window_bounds = array<i64: 1, 8, 256>}]} {
    %0 = tpu.iota {dimensions = array<i32: 1>} : vector<1x256xi32>
    %c15_i32 = arith.constant 15 : i32
    %1 = vector.broadcast %c15_i32 : i32 to vector<1x256xi32>
    %2 = arith.andi %0, %1 : vector<1x256xi32>
    %c0_i32 = arith.constant 0 : i32
    %3 = vector.broadcast %c0_i32 : i32 to vector<1x256xi32>
    %4 = arith.cmpi ne, %2, %3 : vector<1x256xi32>
    %5 = arith.extui %4 : vector<1x256xi1> to vector<1x256xi32>
    %6 = arith.sitofp %5 : vector<1x256xi32> to vector<1x256xf32>
    %c15_i32_0 = arith.constant 15 : i32
    %7 = vector.broadcast %c15_i32_0 : i32 to vector<1x256xi32>
    %8 = arith.cmpi ne, %2, %7 : vector<1x256xi32>
    %9 = arith.extui %8 : vector<1x256xi1> to vector<1x256xi32>
    %10 = arith.sitofp %9 : vector<1x256xi32> to vector<1x256xf32>
    %cst = arith.constant 0.000000e+00 : f32
    %11 = vector.broadcast %cst : f32 to vector<8x290xf32>
    %c0 = arith.constant 0 : index
    %c0_1 = arith.constant 0 : index
    %12 = vector.load %arg4[%c0, %c0_1] : memref<8x290xf32, #tpu.memory_space<vmem>>, vector<8x290xf32>
    tpu.vector_store %arg4[%c0, %c0_1], %11 {strides = array<i32>} : memref<8x290xf32, #tpu.memory_space<vmem>>, vector<8x290xf32>,
    %c0_2 = arith.constant 0 : index
    %c0_3 = arith.constant 0 : index
    %c0_4 = arith.constant 0 : index
    %13 = vector.load %arg1[%c0_2, %c0_3, %c0_4] : memref<1x8x256xf32, #tpu.memory_space<vmem>>, vector<1x8x256xf32>
    %14 = vector.shape_cast %13 : vector<1x8x256xf32> to vector<8x256xf32>
    %c0_5 = arith.constant 0 : index
    %c17 = arith.constant 17 : index
    %15 = vector.load %arg4[%c0_5, %c17] : memref<8x290xf32, #tpu.memory_space<vmem>>, vector<8x256xf32>
    tpu.vector_store %arg4[%c0_5, %c17], %14 {strides = array<i32>} : memref<8x290xf32, #tpu.memory_space<vmem>>, vector<8x256xf32>,
    %c0_6 = arith.constant 0 : index
    %c0_7 = arith.constant 0 : index
    %16 = vector.load %arg4[%c0_6, %c0_7] : memref<8x290xf32, #tpu.memory_space<vmem>>, vector<8x256xf32>
    %17 = vector.broadcast %6 : vector<1x256xf32> to vector<8x256xf32>
    %18 = arith.mulf %16, %17 : vector<8x256xf32>
    %c0_8 = arith.constant 0 : index
    %c0_9 = arith.constant 0 : index
    %19 = vector.load %arg5[%c0_8, %c0_9] : memref<72x256xf32, #tpu.memory_space<vmem>>, vector<8x256xf32>
    tpu.vector_store %arg5[%c0_8, %c0_9], %18 {strides = array<i32>} : memref<72x256xf32, #tpu.memory_space<vmem>>, vector<8x256xf32>,
    %c0_10 = arith.constant 0 : index
    %c16 = arith.constant 16 : index
    %20 = vector.load %arg4[%c0_10, %c16] : memref<8x290xf32, #tpu.memory_space<vmem>>, vector<8x256xf32>
    %21 = vector.broadcast %6 : vector<1x256xf32> to vector<8x256xf32>
    %22 = arith.mulf %20, %21 : vector<8x256xf32>
    %c8 = arith.constant 8 : index
    %c0_11 = arith.constant 0 : index
    %23 = vector.load %arg5[%c8, %c0_11] : memref<72x256xf32, #tpu.memory_space<vmem>>, vector<8x256xf32>
    tpu.vector_store %arg5[%c8, %c0_11], %22 {strides = array<i32>} : memref<72x256xf32, #tpu.memory_space<vmem>>, vector<8x256xf32>,
    %c0_12 = arith.constant 0 : index
    %c32 = arith.constant 32 : index
    %24 = vector.load %arg4[%c0_12, %c32] : memref<8x290xf32, #tpu.memory_space<vmem>>, vector<8x256xf32>
    %25 = vector.broadcast %6 : vector<1x256xf32> to vector<8x256xf32>
    %26 = arith.mulf %24, %25 : vector<8x256xf32>
    %c16_13 = arith.constant 16 : index
    %c0_14 = arith.constant 0 : index
    %27 = vector.load %arg5[%c16_13, %c0_14] : memref<72x256xf32, #tpu.memory_space<vmem>>, vector<8x256xf32>
    tpu.vector_store %arg5[%c16_13, %c0_14], %26 {strides = array<i32>} : memref<72x256xf32, #tpu.memory_space<vmem>>, vector<8x256xf32>,
    %c0_15 = arith.constant 0 : index
    %c1 = arith.constant 1 : index
    %28 = vector.load %arg4[%c0_15, %c1] : memref<8x290xf32, #tpu.memory_space<vmem>>, vector<8x256xf32>
    %c24 = arith.constant 24 : index
    %c0_16 = arith.constant 0 : index
    %29 = vector.load %arg5[%c24, %c0_16] : memref<72x256xf32, #tpu.memory_space<vmem>>, vector<8x256xf32>
    tpu.vector_store %arg5[%c24, %c0_16], %28 {strides = array<i32>} : memref<72x256xf32, #tpu.memory_space<vmem>>, vector<8x256xf32>,
    %c0_17 = arith.constant 0 : index
    %c17_18 = arith.constant 17 : index
    %30 = vector.load %arg4[%c0_17, %c17_18] : memref<8x290xf32, #tpu.memory_space<vmem>>, vector<8x256xf32>
    %c32_19 = arith.constant 32 : index
    %c0_20 = arith.constant 0 : index
    %31 = vector.load %arg5[%c32_19, %c0_20] : memref<72x256xf32, #tpu.memory_space<vmem>>, vector<8x256xf32>
    tpu.vector_store %arg5[%c32_19, %c0_20], %30 {strides = array<i32>} : memref<72x256xf32, #tpu.memory_space<vmem>>, vector<8x256xf32>,
    %c0_21 = arith.constant 0 : index
    %c33 = arith.constant 33 : index
    %32 = vector.load %arg4[%c0_21, %c33] : memref<8x290xf32, #tpu.memory_space<vmem>>, vector<8x256xf32>
    %c40 = arith.constant 40 : index
    %c0_22 = arith.constant 0 : index
    %33 = vector.load %arg5[%c40, %c0_22] : memref<72x256xf32, #tpu.memory_space<vmem>>, vector<8x256xf32>
    tpu.vector_store %arg5[%c40, %c0_22], %32 {strides = array<i32>} : memref<72x256xf32, #tpu.memory_space<vmem>>, vector<8x256xf32>,
    %c0_23 = arith.constant 0 : index
    %c2 = arith.constant 2 : index
    %34 = vector.load %arg4[%c0_23, %c2] : memref<8x290xf32, #tpu.memory_space<vmem>>, vector<8x256xf32>
    %35 = vector.broadcast %10 : vector<1x256xf32> to vector<8x256xf32>
    %36 = arith.mulf %34, %35 : vector<8x256xf32>
    %c48 = arith.constant 48 : index
    %c0_24 = arith.constant 0 : index
    %37 = vector.load %arg5[%c48, %c0_24] : memref<72x256xf32, #tpu.memory_space<vmem>>, vector<8x256xf32>
    tpu.vector_store %arg5[%c48, %c0_24], %36 {strides = array<i32>} : memref<72x256xf32, #tpu.memory_space<vmem>>, vector<8x256xf32>,
    %c0_25 = arith.constant 0 : index
    %c18 = arith.constant 18 : index
    %38 = vector.load %arg4[%c0_25, %c18] : memref<8x290xf32, #tpu.memory_space<vmem>>, vector<8x256xf32>
    %39 = vector.broadcast %10 : vector<1x256xf32> to vector<8x256xf32>
    %40 = arith.mulf %38, %39 : vector<8x256xf32>
    %c56 = arith.constant 56 : index
    %c0_26 = arith.constant 0 : index
    %41 = vector.load %arg5[%c56, %c0_26] : memref<72x256xf32, #tpu.memory_space<vmem>>, vector<8x256xf32>
    tpu.vector_store %arg5[%c56, %c0_26], %40 {strides = array<i32>} : memref<72x256xf32, #tpu.memory_space<vmem>>, vector<8x256xf32>,
    %c0_27 = arith.constant 0 : index
    %c34 = arith.constant 34 : index
    %42 = vector.load %arg4[%c0_27, %c34] : memref<8x290xf32, #tpu.memory_space<vmem>>, vector<8x256xf32>
    %43 = vector.broadcast %10 : vector<1x256xf32> to vector<8x256xf32>
    %44 = arith.mulf %42, %43 : vector<8x256xf32>
    %c64 = arith.constant 64 : index
    %c0_28 = arith.constant 0 : index
    %45 = vector.load %arg5[%c64, %c0_28] : memref<72x256xf32, #tpu.memory_space<vmem>>, vector<8x256xf32>
    tpu.vector_store %arg5[%c64, %c0_28], %44 {strides = array<i32>} : memref<72x256xf32, #tpu.memory_space<vmem>>, vector<8x256xf32>,
    %c0_29 = arith.constant 0 : index
    %c0_30 = arith.constant 0 : index
    %46 = vector.load %arg2[%c0_29, %c0_30] : memref<8x72xbf16, #tpu.memory_space<vmem>>, vector<8x72xbf16>
    %c0_31 = arith.constant 0 : index
    %c0_32 = arith.constant 0 : index
    %47 = vector.load %arg5[%c0_31, %c0_32] : memref<72x256xf32, #tpu.memory_space<vmem>>, vector<72x256xf32>
    %48 = arith.truncf %47 : vector<72x256xf32> to vector<72x256xbf16>
    %cst_33 = arith.constant dense<0.000000e+00> : vector<8x256xf32>
    %49 = tpu.matmul %46, %48, %cst_33 {dimension_numbers = #tpu.dot_dimension_numbers<[1], [0], [0], [1], [0, 0, 1, 1], [], []>} : vector<8x72xbf16>, vector<72x256xbf16>, vector<8x256xf32> -> vector<8x256xf32>
    %cst_34 = arith.constant dense<0.000000e+00> : vector<8xf32>
    %50 = vector.multi_reduction <add>, %49, %cst_34 [1] : vector<8x256xf32> to vector<8xf32>
    %51 = vector.shape_cast %50 : vector<8xf32> to vector<8x1xf32>
    %52 = arith.mulf %49, %49 : vector<8x256xf32>
    %cst_35 = arith.constant dense<0.000000e+00> : vector<8xf32>
    %53 = vector.multi_reduction <add>, %52, %cst_35 [1] : vector<8x256xf32> to vector<8xf32>
    %54 = vector.shape_cast %53 : vector<8xf32> to vector<8x1xf32>
    %cst_36 = arith.constant 3.906250e-03 : f32
    %55 = vector.broadcast %cst_36 : f32 to vector<8x1xf32>
    %56 = arith.mulf %51, %55 : vector<8x1xf32>
    %cst_37 = arith.constant 3.906250e-03 : f32
    %57 = vector.broadcast %cst_37 : f32 to vector<8x1xf32>
    %58 = arith.mulf %54, %57 : vector<8x1xf32>
    %59 = arith.mulf %56, %56 : vector<8x1xf32>
    %60 = arith.subf %58, %59 : vector<8x1xf32>
    %cst_38 = arith.constant 0.000000e+00 : f32
    %61 = vector.broadcast %cst_38 : f32 to vector<8x1xf32>
    %62 = arith.maximumf %60, %61 : vector<8x1xf32>
    %cst_39 = arith.constant 9.99999974E-6 : f32
    %63 = vector.broadcast %cst_39 : f32 to vector<8x1xf32>
    %64 = arith.addf %62, %63 : vector<8x1xf32>
    %65 = math.rsqrt %64 : vector<8x1xf32>
    %66 = vector.broadcast %56 : vector<8x1xf32> to vector<8x256xf32>
    %67 = arith.subf %49, %66 : vector<8x256xf32>
    %68 = vector.broadcast %65 : vector<8x1xf32> to vector<8x256xf32>
    %69 = arith.mulf %67, %68 : vector<8x256xf32>
    %cst_40 = arith.constant 0.000000e+00 : f32
    %70 = vector.broadcast %cst_40 : f32 to vector<8x256xf32>
    %71 = arith.maximumf %69, %70 : vector<8x256xf32>
    %72 = arith.addf %71, %14 : vector<8x256xf32>
    %c0_41 = arith.constant 0 : index
    %c0_42 = arith.constant 0 : index
    %c0_43 = arith.constant 0 : index
    %73 = vector.load %arg3[%c0_41, %c0_42, %c0_43] : memref<1x8x256xf32, #tpu.memory_space<vmem>>, vector<1x8x256xf32>
    %74 = vector.shape_cast %73 : vector<1x8x256xf32> to vector<8x256xf32>
    %75 = vector.shape_cast %72 : vector<8x256xf32> to vector<1x8x256xf32>
    tpu.vector_store %arg3[%c0_41, %c0_42, %c0_43], %75 {strides = array<i32>} : memref<1x8x256xf32, #tpu.memory_space<vmem>>, vector<1x8x256xf32>,
    return
  }
  func.func @transform_0(%arg0: i32) -> (i32, i32, i32) {
    %c0_i32 = arith.constant 0 : i32
    %c0_i32_0 = arith.constant 0 : i32
    %c0_i32_1 = arith.constant 0 : i32
    return %arg0, %c0_i32, %c0_i32_0 : i32, i32, i32
  }
  func.func @transform_1(%arg0: i32) -> (i32, i32) {
    %c0_i32 = arith.constant 0 : i32
    %c0_i32_0 = arith.constant 0 : i32
    %c0_i32_1 = arith.constant 0 : i32
    return %c0_i32, %c0_i32_0 : i32, i32
  }
  func.func @transform_2(%arg0: i32) -> (i32, i32, i32) {
    %c0_i32 = arith.constant 0 : i32
    %c0_i32_0 = arith.constant 0 : i32
    %c0_i32_1 = arith.constant 0 : i32
    return %arg0, %c0_i32, %c0_i32_0 : i32, i32, i32
  }
}

</mosaic_0001>

<llo_original>
// kernel: tpu_custom_call.1
$region0: #{tpu_custom_call.1}
  #allocation0 [shape = 'u32[]', space=smem, size = 0x4, offset = 0x4, fixed_abs, tag = 'smem constant byte address 0x4 - core index']
  #allocation1 [shape = 'u32[72,128]{1,0:T(1,128)}', space=vmem, size = 0x9000, scoped, tag = 'internal scratch']
  #allocation2 [shape = 'f32[8,290]{1,0:T(8,128)}', space=vmem, size = 0x3000, scoped, tag = 'scratch operand']
  #allocation3 [shape = 'f32[72,256]{1,0:T(8,128)}', space=vmem, size = 0x12000, scoped, tag = 'scratch operand']
  %s0 = inlined_call_operand.hbm [shape: f32[2,8,256], index: 0, kind: input, shape index: {}]
  %s1 = inlined_call_operand.hbm [shape: bf16[8,72], index: 1, kind: input, shape index: {}]
  %s2 = inlined_call_operand.hbm [shape: f32[2,8,256], index: 2, kind: output, shape index: {}]
  %s3 = sld [smem:[#allocation0]]
  $region49: #{tpu_custom_call.1} parent=0
    _
  %s5 = ssub.s32 1, %s3
  %s6 = scalar_select 0, %s5, %s3
  $region1: #{tpu_custom_call.1} parent=0
    #allocation4 [shape = 'u8[16384]{0}', space=vmem, size = 0x4000, scoped, tag = 'input window, operand 0']
    #allocation5 [shape = 's32[2]{0}', space=sflag, size = 0x8, scoped, tag = 'scoped memory for tpu_custom_call.1']
    #allocation6 [shape = 's32[2]{0}', space=sflag, size = 0x8, scoped, tag = 'scoped memory for tpu_custom_call.1']
    #allocation7 [shape = 'u8[2048]{0}', space=vmem, size = 0x800, scoped, tag = 'input window, operand 1, single buffered']
    #allocation8 [shape = 's32[1]{0}', space=sflag, size = 0x4, scoped, tag = 'scoped memory for tpu_custom_call.1']
    #allocation9 [shape = 'u8[16384]{0}', space=vmem, size = 0x4000, scoped, tag = 'output window, operand 0']
    %7 = vsyncpa [#allocation5], 0
    %s8 = scalar_lea.sflag [#allocation5], 1
    %9 = vsyncpa %s8, 0
    %10 = vsyncpa [#allocation8], 0
    %11 = vsyncpa [#allocation6], 0
    %s12 = scalar_lea.sflag [#allocation6], 1
    %13 = vsyncpa %s12, 0
    loop: start=0, step=1, limit=4
    $region2: #{tpu_custom_call.1} parent=1 // loop_pre_header
      _
    $region3: #{tpu_custom_call.1} parent=1 // loop_header
      %s15 = sphi 0, %s19
      %p16 = scmp.ge.s32.totalorder %s15, 4
      %s25 = sphi 0, %s27
      %s28 = sphi 0, %s25
      %s29 = sphi 0, %s28
      %s45 = sphi 0, %s29
      %s49 = sphi 0, %s49
      %s51 = sphi 0, %s49
      %s52 = sphi 0, %s51
      %s66 = sphi 0, %s52
      %s72 = sphi 0, %s74
      %s75 = sphi 0, %s72
      %s76 = sphi 0, %s75
      %s92 = sphi 0, %s76
    $region4: #{tpu_custom_call.1} parent=1 // loop_header_branch
      %18 = sbr.rel (%p16) target = $region8
    $region5: #{tpu_custom_call.1} parent=1 // loop_body
      %s20 = ssub.s32 %s15, 1
      %s21 = ssub.s32 %s15, 2
      %s22 = sadd.s32 %s15, 1
      %s23 = ssub.s32 %s15, %s22
      %p24 = scmp.eq.s32.totalorder %s23, 0
      %s26 = sadd.s32 %s25, 1
      %s27 = scalar_select %p24, %s25, %s26
      %p30 = pneg %p24
      %p31 = scmp.eq.s32.totalorder %s15, 1
      %p32 = por %p30, %p31
      %p33 = scmp.ne.s32.totalorder %s25, %s28
      %p34 = scmp.eq.s32.totalorder %s15, 0
      %p35 = por %p33, %p34
      %p36 = scmp.ne.s32.totalorder %s25, %s28
      %p37 = scmp.eq.s32.totalorder %s20, 1
      %p38 = por %p36, %p37
      %p39 = scmp.ne.s32.totalorder %s28, %s29
      %p40 = scmp.eq.s32.totalorder %s20, 0
      %p41 = por %p39, %p40
      %p42 = scmp.ne.s32.totalorder %s28, %s29
      %p43 = scmp.eq.s32.totalorder %s21, 1
      %p44 = por %p42, %p43
      %p46 = scmp.ne.s32.totalorder %s29, %s45
      %p47 = scmp.eq.s32.totalorder %s21, 0
      %p48 = por %p46, %p47
      %s50 = sadd.s32 %s49, 1
      %p53 = scmp.eq.s32.totalorder %s15, 1
      %p54 = scmp.ne.s32.totalorder %s49, %s51
      %p55 = scmp.eq.s32.totalorder %s15, 0
      %p56 = por %p54, %p55
      %p57 = scmp.ne.s32.totalorder %s49, %s51
      %p58 = scmp.eq.s32.totalorder %s20, 1
      %p59 = por %p57, %p58
      %p60 = scmp.ne.s32.totalorder %s51, %s52
      %p61 = scmp.eq.s32.totalorder %s20, 0
      %p62 = por %p60, %p61
      %p63 = scmp.ne.s32.totalorder %s51, %s52
      %p64 = scmp.eq.s32.totalorder %s21, 1
      %p65 = por %p63, %p64
      %p67 = scmp.ne.s32.totalorder %s52, %s66
      %p68 = scmp.eq.s32.totalorder %s21, 0
      %p69 = por %p67, %p68
      %s70 = ssub.s32 %s15, %s22
      %p71 = scmp.eq.s32.totalorder %s70, 0
      %s73 = sadd.s32 %s72, 1
      %s74 = scalar_select %p71, %s72, %s73
      %p77 = pneg %p71
      %p78 = scmp.eq.s32.totalorder %s15, 1
      %p79 = por %p77, %p78
      %p80 = scmp.ne.s32.totalorder %s72, %s75
      %p81 = scmp.eq.s32.totalorder %s15, 0
      %p82 = por %p80, %p81
      %p83 = scmp.ne.s32.totalorder %s72, %s75
      %p84 = scmp.eq.s32.totalorder %s20, 1
      %p85 = por %p83, %p84
      %p86 = scmp.ne.s32.totalorder %s75, %s76
      %p87 = scmp.eq.s32.totalorder %s20, 0
      %p88 = por %p86, %p87
      %p89 = scmp.ne.s32.totalorder %s75, %s76
      %p90 = scmp.eq.s32.totalorder %s21, 1
      %p91 = por %p89, %p90
      %p93 = scmp.ne.s32.totalorder %s76, %s92
      %p94 = scmp.eq.s32.totalorder %s21, 0
      %p95 = por %p93, %p94
      %p96 = scmp.le.s32.totalorder 1, %s15
      %p97 = scmp.lt.s32.totalorder %s15, 3
      %p98 = pnand %p96, %p97
      %p99 = pneg %p98
      // Predicated region
      $region9: #{tpu_custom_call.1} parent=5 // pred_check
        _
      $region10: #{tpu_custom_call.1} parent=5 // pred_check_branch
        %101 = sbr.rel (%p98) target = $region12
      $region11: #{tpu_custom_call.1} parent=5 // pred_region
        %s102 = ssub.s32 %s15, 1
        // Predicated region
        $region13: #{tpu_custom_call.1} parent=11 // pred_check
          %p103 = pneg %p62
        $region14: #{tpu_custom_call.1} parent=11 // pred_check_branch
          %105 = sbr.rel (%p103) target = $region16
        $region15: #{tpu_custom_call.1} parent=11 // pred_region
          %107 = vsyncadd [#allocation8], 0
          %s109 = sshll.u32 %s1, 4
          %s110 = int_to_ptr.hbm [resolvable:$true] %s109
          %s111 = sshll.u32 [#allocation7], 4
          %s112 = int_to_ptr.vmem [resolvable:$true] %s111
          %114 = dma.hbm_to_vmem [thread:$0]  %s110, 64, %s112, [#allocation8]
        $region16: #{tpu_custom_call.1} parent=11 // pred_fallthru
          _
      $region12: #{tpu_custom_call.1} parent=5 // pred_fallthru
        _
      %p115 = scmp.lt.s32.totalorder %s15, 2
      // Predicated region
      $region17: #{tpu_custom_call.1} parent=5 // pred_check
        %p116 = pneg %p115
      $region18: #{tpu_custom_call.1} parent=5 // pred_check_branch
        %118 = sbr.rel (%p116) target = $region20
      $region19: #{tpu_custom_call.1} parent=5 // pred_region
        // Predicated region
        $region21: #{tpu_custom_call.1} parent=19 // pred_check
          %p119 = pneg %p35
        $region22: #{tpu_custom_call.1} parent=19 // pred_check_branch
          %121 = sbr.rel (%p119) target = $region24
        $region23: #{tpu_custom_call.1} parent=19 // pred_region
          %s122 = sand.u32 %s25, 1
          %s123 = scalar_lea.sflag [#allocation5], %s122
          %s124 = sand.u32 %s25, 1
          %s125 = smul.addr %s124, 16
          %s126 = scalar_lea.vmem [#allocation4], %s125
          %128 = vsyncadd %s123, 0
          %s129 = smul.addr %s15, 2
          %s130 = smul.addr %s129, 8
          %s131 = scalar_lea.hbm %s0, %s130
          %s133 = sshll.u32 %s131, 4
          %s134 = int_to_ptr.hbm [resolvable:$true] %s133
          %s135 = sshll.u32 %s126, 4
          %s136 = int_to_ptr.vmem [resolvable:$true] %s135
          %138 = dma.hbm_to_vmem [thread:$0]  %s134, 256, %s136, %s123
        $region24: #{tpu_custom_call.1} parent=19 // pred_fallthru
          _
      $region20: #{tpu_custom_call.1} parent=5 // pred_fallthru
        _
      %p139 = scmp.le.s32.totalorder 1, %s15
      %p140 = scmp.lt.s32.totalorder %s15, 3
      %p141 = pnand %p139, %p140
      %p142 = pneg %p141
      // Predicated region
      $region25: #{tpu_custom_call.1} parent=5 // pred_check
        _
      $region26: #{tpu_custom_call.1} parent=5 // pred_check_branch
        %144 = sbr.rel (%p141) target = $region28
      $region27: #{tpu_custom_call.1} parent=5 // pred_region
        %s145 = ssub.s32 %s15, 1
        %s146 = sand.u32 %s28, 1
        %s147 = scalar_lea.sflag [#allocation5], %s146
        %s148 = sand.u32 %s28, 1
        %s149 = smul.addr %s148, 16
        %s150 = scalar_lea.vmem [#allocation4], %s149
        // Predicated region
        $region29: #{tpu_custom_call.1} parent=27 // pred_check
          %p151 = pneg %p41
        $region30: #{tpu_custom_call.1} parent=27 // pred_check_branch
          %153 = sbr.rel (%p151) target = $region32
        $region31: #{tpu_custom_call.1} parent=27 // pred_region
          %155 = dma.done %s147, 256
        $region32: #{tpu_custom_call.1} parent=27 // pred_fallthru
          _
        // Predicated region
        $region33: #{tpu_custom_call.1} parent=27 // pred_check
          %p156 = pneg %p62
        $region34: #{tpu_custom_call.1} parent=27 // pred_check_branch
          %158 = sbr.rel (%p156) target = $region36
        $region35: #{tpu_custom_call.1} parent=27 // pred_region
          %160 = dma.done [#allocation8], 64
        $region36: #{tpu_custom_call.1} parent=27 // pred_fallthru
          _
        %s161 = sand.u32 %s28, 1
        %s162 = scalar_lea.sflag [#allocation5], %s161
        %s163 = sand.u32 %s28, 1
        %s164 = smul.addr %s163, 16
        %s165 = scalar_lea.vmem [#allocation4], %s164
        %p166 = pneg %p41
        %p167 = pneg %p38
        %p168 = pneg %p62
        %p169 = pneg %p59
        %p170 = pneg %p88
        %p171 = pneg %p85
        %s172 = sand.u32 %s75, 1
        %s173 = scalar_lea.sflag [#allocation6], %s172
        %s174 = sand.u32 %s75, 1
        %s175 = smul.addr %s174, 16
        %s176 = scalar_lea.vmem [#allocation9], %s175
        %v178 = vlaneseq
        %v179 = vand.u32 %v178, 127
        %v180 = vadd.s32 %v179, 128
        %v181 = vand.u32 %v179, 15
        %v182 = vand.u32 %v180, 15
        %vm183 = vcmp.ne.s32.totalorder %v181, 0
        %vm184 = vcmp.ne.s32.totalorder %v182, 0
        %v185 = vsel %vm183, 1, 0
        %v186 = vsel %vm184, 1, 0
        %v187 = vcvt.s32.f32 %v185
        %v188 = vcvt.s32.f32 %v186
        %vm189 = vcmp.ne.s32.totalorder %v181, 15
        %vm190 = vcmp.ne.s32.totalorder %v182, 15
        %v191 = vsel %vm189, 1, 0
        %v192 = vsel %vm190, 1, 0
        %v193 = vcvt.s32.f32 %v191
        %v194 = vcvt.s32.f32 %v192
        %195 = vst [vmem:[#allocation2] sm:$0xff] 0.0
        %196 = vst [vmem:[#allocation2 + $0x8] sm:$0xff] 0.0
        %vm197 = vcmask 277504
        %198 = vst.msk [vmem:[#allocation2 + $0x10] sm:$0xff] %vm197, 0.0
        %v199 = vld [vmem:[%s150] sm:$0xff]
        %v200 = vld [vmem:[%s150 + $0x8] sm:$0xff]
        %203 = vrot.lane.b32.xlu0 %v199, 17
        %v204 = vpop.permute.xlu0 %203
        %205 = vrot.lane.b32.xlu0 %v200, 17
        %v206 = vpop.permute.xlu0 %205
        %vm207 = vcmask 138240
        %v208 = vsel %vm207, %v204, %v206
        %vm212 = vcmask 1047688
        %213 = vst.msk [vmem:[#allocation2] sm:$0xff] %vm212, %v204
        %214 = vst [vmem:[#allocation2 + $0x8] sm:$0xff] %v208
        %215 = vst.msk [vmem:[#allocation2 + $0x10] sm:$0xff] %vm207, %v206
        %v216 = vld [vmem:[#allocation2] sm:$0xff]
        %v217 = vld [vmem:[#allocation2 + $0x8] sm:$0xff]
        %v218 = vmul.f32 %v216, %v187
        %v219 = vmul.f32 %v217, %v188
        %220 = vst [vmem:[#allocation3] sm:$0xff] %v218
        %221 = vst [vmem:[#allocation3 + $0x8] sm:$0xff] %v219
        %v222 = vld [vmem:[#allocation2] sm:$0xff]
        %v223 = vld [vmem:[#allocation2 + $0x8] sm:$0xff]
        %v224 = vld [vmem:[#allocation2 + $0x10] sm:$0xff]
        %227 = vrot.lane.b32.xlu0 %v187, 16
        %v228 = vpop.permute.xlu0 %227
        %229 = vrot.lane.b32.xlu0 %v188, 16
        %v230 = vpop.permute.xlu0 %229
        %vm231 = vcmask 130048
        %v232 = vsel %vm231, %v228, %v230
        %v236 = vmul.f32 %v222, %v228
        %v237 = vmul.f32 %v223, %v232
        %v238 = vmul.f32 %v224, %v230
        %242 = vrot.lane.b32.xlu0 %v236, 112
        %v243 = vpop.permute.xlu0 %242
        %244 = vrot.lane.b32.xlu0 %v237, 112
        %v245 = vpop.permute.xlu0 %244
        %246 = vrot.lane.b32.xlu0 %v238, 112
        %v247 = vpop.permute.xlu0 %246
        %vm248 = vcmask 916480
        %v249 = vsel %vm248, %v243, %v245
        %v250 = vsel %vm248, %v245, %v247
        %253 = vst [vmem:[#allocation3 + $0x10] sm:$0xff] %v249
        %254 = vst [vmem:[#allocation3 + $0x18] sm:$0xff] %v250
        %v255 = vld [vmem:[#allocation2] sm:$0xff]
        %v256 = vld [vmem:[#allocation2 + $0x8] sm:$0xff]
        %v257 = vld [vmem:[#allocation2 + $0x10] sm:$0xff]
        %258 = vrot.lane.b32.xlu0 %v187, 32
        %v259 = vpop.permute.xlu0 %258
        %260 = vrot.lane.b32.xlu0 %v188, 32
        %v261 = vpop.permute.xlu0 %260
        %vm262 = vcmask 261120
        %v263 = vsel %vm262, %v259, %v261
        %v267 = vmul.f32 %v255, %v259
        %v268 = vmul.f32 %v256, %v263
        %v269 = vmul.f32 %v257, %v261
        %273 = vrot.lane.b32.xlu0 %v267, 96
        %v274 = vpop.permute.xlu0 %273
        %275 = vrot.lane.b32.xlu0 %v268, 96
        %v276 = vpop.permute.xlu0 %275
        %277 = vrot.lane.b32.xlu0 %v269, 96
        %v278 = vpop.permute.xlu0 %277
        %vm279 = vcmask 785408
        %v280 = vsel %vm279, %v274, %v276
        %v281 = vsel %vm279, %v276, %v278
        %284 = vst [vmem:[#allocation3 + $0x20] sm:$0xff] %v280
        %285 = vst [vmem:[#allocation3 + $0x28] sm:$0xff] %v281
        %v286 = vld [vmem:[#allocation2] sm:$0xff]
        %v287 = vld [vmem:[#allocation2 + $0x8] sm:$0xff]
        %v288 = vld [vmem:[#allocation2 + $0x10] sm:$0xff]
        %292 = vrot.lane.b32.xlu0 %v286, 127
        %v293 = vpop.permute.xlu0 %292
        %294 = vrot.lane.b32.xlu0 %v287, 127
        %v295 = vpop.permute.xlu0 %294
        %296 = vrot.lane.b32.xlu0 %v288, 127
        %v297 = vpop.permute.xlu0 %296
        %vm298 = vcmask 1039360
        %v299 = vsel %vm298, %v293, %v295
        %v300 = vsel %vm298, %v295, %v297
        %303 = vst [vmem:[#allocation3 + $0x30] sm:$0xff] %v299
        %304 = vst [vmem:[#allocation3 + $0x38] sm:$0xff] %v300
        %v305 = vld [vmem:[#allocation2] sm:$0xff]
        %v306 = vld [vmem:[#allocation2 + $0x8] sm:$0xff]
        %v307 = vld [vmem:[#allocation2 + $0x10] sm:$0xff]
        %311 = vrot.lane.b32.xlu0 %v305, 111
        %v312 = vpop.permute.xlu0 %311
        %313 = vrot.lane.b32.xlu0 %v306, 111
        %v314 = vpop.permute.xlu0 %313
        %315 = vrot.lane.b32.xlu0 %v307, 111
        %v316 = vpop.permute.xlu0 %315
        %vm317 = vcmask 908288
        %v318 = vsel %vm317, %v312, %v314
        %v319 = vsel %vm317, %v314, %v316
        %322 = vst [vmem:[#allocation3 + $0x40] sm:$0xff] %v318
        %323 = vst [vmem:[#allocation3 + $0x48] sm:$0xff] %v319
        %v324 = vld [vmem:[#allocation2] sm:$0xff]
        %v325 = vld [vmem:[#allocation2 + $0x8] sm:$0xff]
        %v326 = vld [vmem:[#allocation2 + $0x10] sm:$0xff]
        %330 = vrot.lane.b32.xlu0 %v324, 95
        %v331 = vpop.permute.xlu0 %330
        %332 = vrot.lane.b32.xlu0 %v325, 95
        %v333 = vpop.permute.xlu0 %332
        %334 = vrot.lane.b32.xlu0 %v326, 95
        %v335 = vpop.permute.xlu0 %334
        %vm336 = vcmask 777216
        %v337 = vsel %vm336, %v331, %v333
        %v338 = vsel %vm336, %v333, %v335
        %341 = vst [vmem:[#allocation3 + $0x50] sm:$0xff] %v337
        %342 = vst [vmem:[#allocation3 + $0x58] sm:$0xff] %v338
        %v343 = vld [vmem:[#allocation2] sm:$0xff]
        %v344 = vld [vmem:[#allocation2 + $0x8] sm:$0xff]
        %v345 = vld [vmem:[#allocation2 + $0x10] sm:$0xff]
        %348 = vrot.lane.b32.xlu0 %v193, 2
        %v349 = vpop.permute.xlu0 %348
        %350 = vrot.lane.b32.xlu0 %v194, 2
        %v351 = vpop.permute.xlu0 %350
        %vm352 = vcmask 15360
        %v353 = vsel %vm352, %v349, %v351
        %v357 = vmul.f32 %v343, %v349
        %v358 = vmul.f32 %v344, %v353
        %v359 = vmul.f32 %v345, %v351
        %363 = vrot.lane.b32.xlu0 %v357, 126
        %v364 = vpop.permute.xlu0 %363
        %365 = vrot.lane.b32.xlu0 %v358, 126
        %v366 = vpop.permute.xlu0 %365
        %367 = vrot.lane.b32.xlu0 %v359, 126
        %v368 = vpop.permute.xlu0 %367
        %vm369 = vcmask 1031168
        %v370 = vsel %vm369, %v364, %v366
        %v371 = vsel %vm369, %v366, %v368
        %374 = vst [vmem:[#allocation3 + $0x60] sm:$0xff] %v370
        %375 = vst [vmem:[#allocation3 + $0x68] sm:$0xff] %v371
        %v376 = vld [vmem:[#allocation2] sm:$0xff]
        %v377 = vld [vmem:[#allocation2 + $0x8] sm:$0xff]
        %v378 = vld [vmem:[#allocation2 + $0x10] sm:$0xff]
        %379 = vrot.lane.b32.xlu0 %v193, 18
        %v380 = vpop.permute.xlu0 %379
        %381 = vrot.lane.b32.xlu0 %v194, 18
        %v382 = vpop.permute.xlu0 %381
        %vm383 = vcmask 146432
        %v384 = vsel %vm383, %v380, %v382
        %v388 = vmul.f32 %v376, %v380
        %v389 = vmul.f32 %v377, %v384
        %v390 = vmul.f32 %v378, %v382
        %394 = vrot.lane.b32.xlu0 %v388, 110
        %v395 = vpop.permute.xlu0 %394
        %396 = vrot.lane.b32.xlu0 %v389, 110
        %v397 = vpop.permute.xlu0 %396
        %398 = vrot.lane.b32.xlu0 %v390, 110
        %v399 = vpop.permute.xlu0 %398
        %vm400 = vcmask 900096
        %v401 = vsel %vm400, %v395, %v397
        %v402 = vsel %vm400, %v397, %v399
        %405 = vst [vmem:[#allocation3 + $0x70] sm:$0xff] %v401
        %406 = vst [vmem:[#allocation3 + $0x78] sm:$0xff] %v402
        %v407 = vld [vmem:[#allocation2] sm:$0xff]
        %v408 = vld [vmem:[#allocation2 + $0x8] sm:$0xff]
        %v409 = vld [vmem:[#allocation2 + $0x10] sm:$0xff]
        %410 = vrot.lane.b32.xlu0 %v193, 34
        %v411 = vpop.permute.xlu0 %410
        %412 = vrot.lane.b32.xlu0 %v194, 34
        %v413 = vpop.permute.xlu0 %412
        %v414 = vsel %vm197, %v411, %v413
        %v418 = vmul.f32 %v407, %v411
        %v419 = vmul.f32 %v408, %v414
        %v420 = vmul.f32 %v409, %v413
        %424 = vrot.lane.b32.xlu0 %v418, 94
        %v425 = vpop.permute.xlu0 %424
        %426 = vrot.lane.b32.xlu0 %v419, 94
        %v427 = vpop.permute.xlu0 %426
        %428 = vrot.lane.b32.xlu0 %v420, 94
        %v429 = vpop.permute.xlu0 %428
        %vm430 = vcmask 769024
        %v431 = vsel %vm430, %v425, %v427
        %v432 = vsel %vm430, %v427, %v429
        %435 = vst [vmem:[#allocation3 + $0x80] sm:$0xff] %v431
        %436 = vst [vmem:[#allocation3 + $0x88] sm:$0xff] %v432
        %v437 = vld [vmem:[#allocation7] sm:$0xf]
        %v438 = vld [vmem:[#allocation3] sm:$0xff]
        %v439 = vld [vmem:[#allocation3 + $0x8] sm:$0xff]
        %v440 = vld [vmem:[#allocation3 + $0x10] sm:$0xff]
        %v441 = vld [vmem:[#allocation3 + $0x18] sm:$0xff]
        %v442 = vld [vmem:[#allocation3 + $0x20] sm:$0xff]
        %v443 = vld [vmem:[#allocation3 + $0x28] sm:$0xff]
        %v444 = vld [vmem:[#allocation3 + $0x30] sm:$0xff]
        %v445 = vld [vmem:[#allocation3 + $0x38] sm:$0xff]
        %v446 = vld [vmem:[#allocation3 + $0x40] sm:$0xff]
        %v447 = vld [vmem:[#allocation3 + $0x48] sm:$0xff]
        %v448 = vld [vmem:[#allocation3 + $0x50] sm:$0xff]
        %v449 = vld [vmem:[#allocation3 + $0x58] sm:$0xff]
        %v450 = vld [vmem:[#allocation3 + $0x60] sm:$0xff]
        %v451 = vld [vmem:[#allocation3 + $0x68] sm:$0xff]
        %v452 = vld [vmem:[#allocation3 + $0x70] sm:$0xff]
        %v453 = vld [vmem:[#allocation3 + $0x78] sm:$0xff]
        %v454 = vld [vmem:[#allocation3 + $0x80] sm:$0xff]
        %v455 = vld [vmem:[#allocation3 + $0x88] sm:$0xff]
        %v456 = vpack.c.bf16 %v440, %v438
        %v457 = vpack.c.bf16 %v441, %v439
        %v458 = vpack.c.bf16 %v444, %v442
        %v459 = vpack.c.bf16 %v445, %v443
        %v460 = vpack.c.bf16 %v448, %v446
        %v461 = vpack.c.bf16 %v449, %v447
        %v462 = vpack.c.bf16 %v452, %v450
        %v463 = vpack.c.bf16 %v453, %v451
        %v464 = vpack.c.bf16 %v454, %v454
        %v465 = vpack.c.bf16 %v455, %v455
        %vm466 = vcmask 588800
        %v468 = vsel %vm466, %v437, 0
        %vm470 = vcmask 1043456
        %v472 = vsel %vm470, %v464, 0
        %v475 = vsel %vm470, %v465, 0
        %477 = vmatpush.bf16.msra.mxu0 0
        %478 = vmatpush.bf16.msra.mxu0 0
        %479 = vmatpush.bf16.msra.mxu0 0
        %480 = vmatpush.bf16.msra.mxu0 %v472
        %481 = vmatpush.bf16.msra.mxu0 %v462
        %482 = vmatpush.bf16.msra.mxu0 %v460
        %483 = vmatpush.bf16.msra.mxu0 %v458
        %484 = vmatpush.bf16.msra.mxu0 %v456
        %485 = vmatmul.bf16.gmra.mxu0 %v468
        %v486 = vpop.f32.mrf.mxu0
        %v487 = vadd.f32 0.0, %v486
        %v488 = vpop.f32.mrf.mxu0
        %489 = vdwg.mxu0
        %490 = vmatpush.bf16.msra.mxu0 0
        %491 = vmatpush.bf16.msra.mxu0 0
        %492 = vmatpush.bf16.msra.mxu0 0
        %493 = vmatpush.bf16.msra.mxu0 %v475
        %494 = vmatpush.bf16.msra.mxu0 %v463
        %495 = vmatpush.bf16.msra.mxu0 %v461
        %496 = vmatpush.bf16.msra.mxu0 %v459
        %497 = vmatpush.bf16.msra.mxu0 %v457
        %498 = vmatmul.bf16.gmra.mxu0 %v468
        %v499 = vpop.f32.mrf.mxu0
        %v500 = vadd.f32 0.0, %v499
        %v501 = vpop.f32.mrf.mxu0
        %502 = vdwg.mxu0
        %v503 = vadd.f32 %v487, %v500
        %504 = vadd.xlane.f32.xlu0 %v503
        %v505 = vpop.xlane.xlu0 %504
        %v506 = vmul.f32 %v487, %v487
        %v507 = vmul.f32 %v500, %v500
        %v508 = vadd.f32 %v506, %v507
        %509 = vadd.xlane.f32.xlu0 %v508
        %v510 = vpop.xlane.xlu0 %509
        %v511 = vmul.f32 %v505, 0.00390625
        %v512 = vmul.f32 %v510, 0.00390625
        %v513 = vmul.f32 %v511, %v511
        %v514 = vsub.f32 %v512, %v513
        %v515 = vmax.f32 %v514, 0.0
        %v516 = vadd.f32 %v515, 1e-05
        %v517 = vrsqrt.pop %v516
        %v518 = vmul.f32 %v517, %v516
        %v519 = vmul.f32 %v518, %v517
        %v520 = vmul.f32 0.5, %v519
        %v521 = vsub.f32 1.5, %v520
        %v522 = vmul.f32 %v517, %v521
        %vm523 = vweird.f32 %v516
        %vm524 = vweird.f32 %v517
        %vm525 = vmor %vm523, %vm524
        %v526 = vsel %vm525, %v517, %v522
        %v527 = vsub.f32 %v487, %v511
        %v528 = vsub.f32 %v500, %v511
        %v529 = vmul.f32 %v527, %v526
        %v530 = vmul.f32 %v528, %v526
        %v531 = vmax.f32 %v529, 0.0
        %v532 = vmax.f32 %v530, 0.0
        %v533 = vadd.f32 %v531, %v199
        %v534 = vadd.f32 %v532, %v200
        %535 = vst [vmem:[%s176] sm:$0xff] %v533
        %536 = vst [vmem:[%s176 + $0x8] sm:$0xff] %v534
        %s537 = sand.u32 %s75, 1
        %s538 = scalar_lea.sflag [#allocation6], %s537
        %s539 = sand.u32 %s75, 1
        %s540 = smul.addr %s539, 16
        %s541 = scalar_lea.vmem [#allocation9], %s540
        // Predicated region
        $region37: #{tpu_custom_call.1} parent=27 // pred_check
          %p542 = pneg %p85
        $region38: #{tpu_custom_call.1} parent=27 // pred_check_branch
          %544 = sbr.rel (%p542) target = $region40
        $region39: #{tpu_custom_call.1} parent=27 // pred_region
          %546 = vsyncadd %s538, 0
          %s547 = smul.addr %s20, 2
          %s548 = smul.addr %s547, 8
          %s549 = scalar_lea.hbm %s2, %s548
          %s551 = sshll.u32 %s541, 4
          %s552 = int_to_ptr.vmem [resolvable:$true] %s551
          %s553 = sshll.u32 %s549, 4
          %s554 = int_to_ptr.hbm [resolvable:$true] %s553
          %556 = dma.vmem_to_hbm [thread:$0]  %s552, 256, %s554, %s538
        $region40: #{tpu_custom_call.1} parent=27 // pred_fallthru
          _
      $region28: #{tpu_custom_call.1} parent=5 // pred_fallthru
        _
      %p557 = scmp.le.s32.totalorder 2, %s15
      // Predicated region
      $region41: #{tpu_custom_call.1} parent=5 // pred_check
        %p558 = pneg %p557
      $region42: #{tpu_custom_call.1} parent=5 // pred_check_branch
        %560 = sbr.rel (%p558) target = $region44
      $region43: #{tpu_custom_call.1} parent=5 // pred_region
        %s561 = ssub.s32 %s15, 2
        // Predicated region
        $region45: #{tpu_custom_call.1} parent=43 // pred_check
          %p562 = pneg %p91
        $region46: #{tpu_custom_call.1} parent=43 // pred_check_branch
          %564 = sbr.rel (%p562) target = $region48
        $region47: #{tpu_custom_call.1} parent=43 // pred_region
          %s565 = sand.u32 %s76, 1
          %s566 = scalar_lea.sflag [#allocation6], %s565
          %s567 = sand.u32 %s76, 1
          %s568 = smul.addr %s567, 16
          %s569 = scalar_lea.vmem [#allocation9], %s568
          %571 = dma.done %s566, 256
        $region48: #{tpu_custom_call.1} parent=43 // pred_fallthru
          _
      $region44: #{tpu_custom_call.1} parent=5 // pred_fallthru
        _
    $region6: #{tpu_custom_call.1} parent=1 // loop_footer
      %s19 = sadd.s32 1, %s15
    $region7: #{tpu_custom_call.1} parent=1 // loop_footer_branch
      %14 = sbr.rel target = $region3
    $region8: #{tpu_custom_call.1} parent=1 // loop_exit
      _
    %572 = vsyncpa [#allocation5], 1
    %s573 = scalar_lea.sflag [#allocation5], 1
    %574 = vsyncpa %s573, 1
    %575 = vsyncpa [#allocation8], 1
    %576 = vsyncpa [#allocation6], 1
    %s577 = scalar_lea.sflag [#allocation6], 1
    %578 = vsyncpa %s577, 1

</llo_original>
